<compile_context>
chip_gen: v7x
topology: tpu7x:2x2x1
jax: 0.10.0
libtpu: 0.0.40
codegen_flags: <defaults>
</compile_context>

<pallas_src>
import jax
import jax.numpy as jnp
from jax import lax
from jax.experimental import pallas as pl
from jax.experimental.pallas import tpu as pltpu


def _round_up(x, m):
    return ((x + m - 1) // m) * m


def critic_kernel(state_ref, action_ref, goal_ref,
                  w1s_ref, w1a_ref, w1g_ref, b1_ref,
                  w2_ref, b2_ref, w3t_ref, b3_ref,
                  out_ref):
    """One batch tile of the Critic MLP (output is a lane-dense (1, TILE_B) row)."""
    # ---- Layer 1: relu([s|a|g] @ W1 + b1) == relu(s@W1s + a@W1a + g@W1g + b1)
    h1 = jnp.dot(state_ref[...], w1s_ref[...], preferred_element_type=jnp.float32)
    h1 = h1 + jnp.dot(action_ref[...], w1a_ref[...], preferred_element_type=jnp.float32)
    h1 = h1 + jnp.dot(goal_ref[...], w1g_ref[...], preferred_element_type=jnp.float32)
    h1 = jnp.maximum(h1 + b1_ref[...], 0.0)                     # f32 elementwise

    # ---- Layer 2: relu(h1 @ W2 + b2) (feed compute dtype into MXU, f32 elementwise)
    h2 = jnp.dot(h1.astype(w2_ref.dtype), w2_ref[...],
                 preferred_element_type=jnp.float32)
    h2 = jnp.maximum(h2 + b2_ref[...], 0.0)

    # ---- Layer 3 (transposed): q_row = (W3^T) @ h2^T  -> (8, TILE_B)
    # W3^T is zero-padded to 8 rows for sublane alignment; rows 1..7 contribute 0.
    q8 = lax.dot_general(
        w3t_ref[...], h2.astype(w3t_ref.dtype),
        dimension_numbers=(((1,), (1,)), ((), ())),              # contract both on dim 1
        preferred_element_type=jnp.float32)
    q = jnp.sum(q8, axis=0, keepdims=True)                       # (1, TILE_B) == row 0
    q = jax.nn.sigmoid(q + b3_ref[0, 0])                         # b3 scalar from SMEM
    out_ref[...] = (-q).astype(out_ref.dtype)


def critic_forward(state, action, goal, params, *, tile_b=1024,
                   compute_dtype=jnp.float32):
    """-sigmoid(MLP(concat(state, action, goal))) via one gridded Pallas kernel."""
    w1s, w1a, w1g, b1, w2, b2, w3t, b3 = params
    B, sd = state.shape
    ad = action.shape[1]
    h1_dim = w1s.shape[1]
    fc = w2.shape[1]

    # Cast HBM-heavy MXU operands to the compute dtype (biases stay f32).
    cd = compute_dtype
    state, action, goal = state.astype(cd), action.astype(cd), goal.astype(cd)
    w1s, w1a, w1g, w2 = w1s.astype(cd), w1a.astype(cd), w1g.astype(cd), w2.astype(cd)
    w3t_pad = jnp.pad(w3t.astype(cd), ((0, 7), (0, 0)))          # (8, fc), rows 1..7 zero
    b1 = b1.astype(jnp.float32)
    b2 = b2.astype(jnp.float32)
    b3 = b3.reshape(1, 1).astype(jnp.float32)

    # Batch tiling: per-tile VMEM is tiny, so the same default works on
    # v5e/v6e/v7x; shrink tile_b further on v7x if desired.
    tile_b = min(tile_b, _round_up(B, 128))
    n_tiles = pl.cdiv(B, tile_b)
    b_pad = n_tiles * tile_b
    if b_pad != B:
        pad = ((0, b_pad - B), (0, 0))
        state = jnp.pad(state, pad)
        action = jnp.pad(action, pad)
        goal = jnp.pad(goal, pad)

    def batch_spec(d):
        return pl.BlockSpec((tile_b, d), lambda i: (i, 0))

    def const_spec(r, c):
        return pl.BlockSpec((r, c), lambda i: (0, 0))            # resident across steps

    out = pl.pallas_call(
        critic_kernel,
        grid=(n_tiles,),
        in_specs=[
            batch_spec(sd),                                       # state
            batch_spec(ad),                                       # action
            batch_spec(sd),                                       # goal
            const_spec(sd, h1_dim),                               # W1 rows for state
            const_spec(ad, h1_dim),                               # W1 rows for action
            const_spec(sd, h1_dim),                               # W1 rows for goal
            const_spec(1, h1_dim),                                # b1
            const_spec(h1_dim, fc),                               # W2
            const_spec(1, fc),                                    # b2
            const_spec(8, fc),                                    # W3^T (padded to 8 rows)
            pl.BlockSpec(memory_space=pltpu.MemorySpace.SMEM),    # b3 scalar
        ],
        out_specs=pl.BlockSpec((1, tile_b), lambda i: (0, i)),    # lane-dense row output
        out_shape=jax.ShapeDtypeStruct((1, b_pad), jnp.float32),
        compiler_params=pltpu.CompilerParams(
            dimension_semantics=("parallel",),                    # shard tiles over TCs
            vmem_limit_bytes=32 * 1024 * 1024,
        ),
    )(state, action, goal, w1s, w1a, w1g, b1, w2, b2, w3t_pad, b3)

    return out[0, :B].reshape(B, 1)


def init_params(key, state_dim, action_dim, fc_units=64):
    """PyTorch-Linear-style uniform init, stored kernel-friendly:
    W as [in, out], W1 pre-split into (state, action, goal) row blocks,
    W3 stored transposed as (1, fc)."""
    in_dim = 2 * state_dim + action_dim
    keys = jax.random.split(key, 6)

    def unif(k, shape, fan_in):
        bound = 1.0 / jnp.sqrt(fan_in)
        return jax.random.uniform(k, shape, jnp.float32, -bound, bound)

    w1 = unif(keys[0], (in_dim, 64), in_dim)        # first hidden width is 64 (as in torch)
    b1 = unif(keys[1], (1, 64), in_dim)
    w2 = unif(keys[2], (64, fc_units), 64)
    b2 = unif(keys[3], (1, fc_units), 64)
    w3 = unif(keys[4], (fc_units, 1), fc_units)
    b3 = unif(keys[5], (1, 1), fc_units)

    w1s = w1[:state_dim]
    w1a = w1[state_dim:state_dim + action_dim]
    w1g = w1[state_dim + action_dim:]
    return (w1s, w1a, w1g, b1, w2, b2, w3.T, b3)


def critic_reference(state, action, goal, params):
    """Pure-JAX reference for correctness checking."""
    w1s, w1a, w1g, b1, w2, b2, w3t, b3 = params
    x = jnp.concatenate([state, action, goal], axis=1).astype(jnp.float32)
    w1 = jnp.concatenate([w1s, w1a, w1g], axis=0)
    h1 = jnp.maximum(x @ w1 + b1, 0.0)
    h2 = jnp.maximum(h1 @ w2 + b2, 0.0)
    return -jax.nn.sigmoid(h2 @ w3t.T + b3)


if __name__ == "__main__":
    key = jax.random.PRNGKey(0)
    k_s, k_a, k_g, k_p = jax.random.split(key, 4)

    batch, state_dim, action_dim = 8, 8, 4

    state = jax.random.normal(k_s, (batch, state_dim), jnp.float32)
    action = jax.random.normal(k_a, (batch, action_dim), jnp.float32)
    goal = jax.random.normal(k_g, (batch, state_dim), jnp.float32)

    params = init_params(k_p, state_dim, action_dim, fc_units=64)
    ref = critic_reference(state, action, goal, params)

    # f32 path (strict check).
    out = jax.block_until_ready(critic_forward(state, action, goal, params))
    assert out.shape == (batch, 1)
    assert jnp.allclose(out, ref, atol=1e-5, rtol=1e-5)

    # Multi-tile path: grid > 1 and batch not divisible by the tile.
    b2_ = 300
    ks2, ka2, kg2 = jax.random.split(jax.random.PRNGKey(1), 3)
    s2 = jax.random.normal(ks2, (b2_, state_dim), jnp.float32)
    a2 = jax.random.normal(ka2, (b2_, action_dim), jnp.float32)
    g2 = jax.random.normal(kg2, (b2_, state_dim), jnp.float32)
    out2 = jax.block_until_ready(critic_forward(s2, a2, g2, params, tile_b=128))
    ref2 = critic_reference(s2, a2, g2, params)
    assert out2.shape == (b2_, 1)
    assert jnp.allclose(out2, ref2, atol=1e-5, rtol=1e-5)

    # bf16 compute-dtype path (v6e/v7x HBM-traffic optimization); loose check.
    out_bf16 = jax.block_until_ready(
        critic_forward(state, action, goal, params, compute_dtype=jnp.bfloat16))
    assert float(jnp.max(jnp.abs(out_bf16 - ref))) < 5e-2

    print("KERNEL_OK")
</pallas_src>

<mosaic_0001>
module attributes {stable_mosaic.version = 11 : i64} {
  func.func @critic_kernel(%arg0: i32, %arg1: memref<128x8xf32, #tpu.memory_space<vmem>>, %arg2: memref<128x4xf32, #tpu.memory_space<vmem>>, %arg3: memref<128x8xf32, #tpu.memory_space<vmem>>, %arg4: memref<8x64xf32, #tpu.memory_space<vmem>>, %arg5: memref<4x64xf32, #tpu.memory_space<vmem>>, %arg6: memref<8x64xf32, #tpu.memory_space<vmem>>, %arg7: memref<1x64xf32, #tpu.memory_space<vmem>>, %arg8: memref<64x64xf32, #tpu.memory_space<vmem>>, %arg9: memref<1x64xf32, #tpu.memory_space<vmem>>, %arg10: memref<8x64xf32, #tpu.memory_space<vmem>>, %arg11: memref<1x1xf32, #tpu.memory_space<smem>>, %arg12: memref<1x128xf32, #tpu.memory_space<vmem>>) attributes {dimension_semantics = [#tpu.dimension_semantics<parallel>], iteration_bounds = array<i64: 1>, scalar_prefetch = 0 : i64, scratch_operands = 0 : i64, tpu.core_type = #tpu.core_type<tc>, window_params = [{transform_indices = @transform_0, window_bounds = array<i64: 128, 8>}, {transform_indices = @transform_1, window_bounds = array<i64: 128, 4>}, {transform_indices = @transform_2, window_bounds = array<i64: 128, 8>}, {pipeline_mode = #tpu.pipeline_mode<synchronous>, transform_indices = @transform_3, window_bounds = array<i64: 8, 64>}, {pipeline_mode = #tpu.pipeline_mode<synchronous>, transform_indices = @transform_4, window_bounds = array<i64: 4, 64>}, {pipeline_mode = #tpu.pipeline_mode<synchronous>, transform_indices = @transform_5, window_bounds = array<i64: 8, 64>}, {pipeline_mode = #tpu.pipeline_mode<synchronous>, transform_indices = @transform_6, window_bounds = array<i64: 1, 64>}, {pipeline_mode = #tpu.pipeline_mode<synchronous>, transform_indices = @transform_7, window_bounds = array<i64: 64, 64>}, {pipeline_mode = #tpu.pipeline_mode<synchronous>, transform_indices = @transform_8, window_bounds = array<i64: 1, 64>}, {pipeline_mode = #tpu.pipeline_mode<synchronous>, transform_indices = @transform_9, window_bounds = array<i64: 8, 64>}, {transform_indices = @transform_10, window_bounds = array<i64: 1, 1>}, {transform_indices = @transform_11, window_bounds = array<i64: 1, 128>}]} {
    %c0 = arith.constant 0 : index
    %c0_0 = arith.constant 0 : index
    %0 = vector.load %arg1[%c0, %c0_0] : memref<128x8xf32, #tpu.memory_space<vmem>>, vector<128x8xf32>
    %c0_1 = arith.constant 0 : index
    %c0_2 = arith.constant 0 : index
    %1 = vector.load %arg4[%c0_1, %c0_2] : memref<8x64xf32, #tpu.memory_space<vmem>>, vector<8x64xf32>
    %cst = arith.constant dense<0.000000e+00> : vector<128x64xf32>
    %2 = tpu.matmul %0, %1, %cst {dimension_numbers = #tpu.dot_dimension_numbers<[1], [0], [0], [1], [0, 0, 1, 1], [], []>} : vector<128x8xf32>, vector<8x64xf32>, vector<128x64xf32> -> vector<128x64xf32>
    %c0_3 = arith.constant 0 : index
    %c0_4 = arith.constant 0 : index
    %3 = vector.load %arg2[%c0_3, %c0_4] : memref<128x4xf32, #tpu.memory_space<vmem>>, vector<128x4xf32>
    %c0_5 = arith.constant 0 : index
    %c0_6 = arith.constant 0 : index
    %4 = vector.load %arg5[%c0_5, %c0_6] : memref<4x64xf32, #tpu.memory_space<vmem>>, vector<4x64xf32>
    %cst_7 = arith.constant dense<0.000000e+00> : vector<128x64xf32>
    %5 = tpu.matmul %3, %4, %cst_7 {dimension_numbers = #tpu.dot_dimension_numbers<[1], [0], [0], [1], [0, 0, 1, 1], [], []>} : vector<128x4xf32>, vector<4x64xf32>, vector<128x64xf32> -> vector<128x64xf32>
    %6 = arith.addf %2, %5 : vector<128x64xf32>
    %c0_8 = arith.constant 0 : index
    %c0_9 = arith.constant 0 : index
    %7 = vector.load %arg3[%c0_8, %c0_9] : memref<128x8xf32, #tpu.memory_space<vmem>>, vector<128x8xf32>
    %c0_10 = arith.constant 0 : index
    %c0_11 = arith.constant 0 : index
    %8 = vector.load %arg6[%c0_10, %c0_11] : memref<8x64xf32, #tpu.memory_space<vmem>>, vector<8x64xf32>
    %cst_12 = arith.constant dense<0.000000e+00> : vector<128x64xf32>
    %9 = tpu.matmul %7, %8, %cst_12 {dimension_numbers = #tpu.dot_dimension_numbers<[1], [0], [0], [1], [0, 0, 1, 1], [], []>} : vector<128x8xf32>, vector<8x64xf32>, vector<128x64xf32> -> vector<128x64xf32>
    %10 = arith.addf %6, %9 : vector<128x64xf32>
    %c0_13 = arith.constant 0 : index
    %c0_14 = arith.constant 0 : index
    %11 = vector.load %arg7[%c0_13, %c0_14] : memref<1x64xf32, #tpu.memory_space<vmem>>, vector<1x64xf32>
    %12 = vector.broadcast %11 : vector<1x64xf32> to vector<128x64xf32>
    %13 = arith.addf %10, %12 : vector<128x64xf32>
    %cst_15 = arith.constant 0.000000e+00 : f32
    %14 = vector.broadcast %cst_15 : f32 to vector<128x64xf32>
    %15 = arith.maximumf %13, %14 : vector<128x64xf32>
    %c0_16 = arith.constant 0 : index
    %c0_17 = arith.constant 0 : index
    %16 = vector.load %arg8[%c0_16, %c0_17] : memref<64x64xf32, #tpu.memory_space<vmem>>, vector<64x64xf32>
    %cst_18 = arith.constant dense<0.000000e+00> : vector<128x64xf32>
    %17 = tpu.matmul %15, %16, %cst_18 {dimension_numbers = #tpu.dot_dimension_numbers<[1], [0], [0], [1], [0, 0, 1, 1], [], []>} : vector<128x64xf32>, vector<64x64xf32>, vector<128x64xf32> -> vector<128x64xf32>
    %c0_19 = arith.constant 0 : index
    %c0_20 = arith.constant 0 : index
    %18 = vector.load %arg9[%c0_19, %c0_20] : memref<1x64xf32, #tpu.memory_space<vmem>>, vector<1x64xf32>
    %19 = vector.broadcast %18 : vector<1x64xf32> to vector<128x64xf32>
    %20 = arith.addf %17, %19 : vector<128x64xf32>
    %cst_21 = arith.constant 0.000000e+00 : f32
    %21 = vector.broadcast %cst_21 : f32 to vector<128x64xf32>
    %22 = arith.maximumf %20, %21 : vector<128x64xf32>
    %c0_22 = arith.constant 0 : index
    %c0_23 = arith.constant 0 : index
    %23 = vector.load %arg10[%c0_22, %c0_23] : memref<8x64xf32, #tpu.memory_space<vmem>>, vector<8x64xf32>
    %cst_24 = arith.constant dense<0.000000e+00> : vector<8x128xf32>
    %24 = tpu.matmul %23, %22, %cst_24 {dimension_numbers = #tpu.dot_dimension_numbers<[1], [1], [0], [0], [0, 0, 1, 0], [], []>} : vector<8x64xf32>, vector<128x64xf32>, vector<8x128xf32> -> vector<8x128xf32>
    %cst_25 = arith.constant dense<0.000000e+00> : vector<128xf32>
    %25 = vector.multi_reduction <add>, %24, %cst_25 [0] : vector<8x128xf32> to vector<128xf32>
    %26 = vector.shape_cast %25 : vector<128xf32> to vector<1x128xf32>
    %c0_26 = arith.constant 0 : index
    %c0_27 = arith.constant 0 : index
    %27 = memref.load %arg11[%c0_26, %c0_27] : memref<1x1xf32, #tpu.memory_space<smem>>
    %28 = vector.broadcast %27 : f32 to vector<1x128xf32>
    %29 = arith.addf %26, %28 : vector<1x128xf32>
    %30 = arith.negf %29 : vector<1x128xf32>
    %31 = math.exp %30 : vector<1x128xf32>
    %cst_28 = arith.constant 1.000000e+00 : f32
    %32 = vector.broadcast %cst_28 : f32 to vector<1x128xf32>
    %33 = arith.addf %32, %31 : vector<1x128xf32>
    %34 = arith.divf %32, %33 : vector<1x128xf32>
    %cst_29 = arith.constant 0.000000e+00 : f32
    %35 = vector.broadcast %cst_29 : f32 to vector<1x128xf32>
    %36 = arith.subf %35, %34 : vector<1x128xf32>
    %c0_30 = arith.constant 0 : index
    %c0_31 = arith.constant 0 : index
    %37 = vector.load %arg12[%c0_30, %c0_31] : memref<1x128xf32, #tpu.memory_space<vmem>>, vector<1x128xf32>
    tpu.vector_store %arg12[%c0_30, %c0_31], %36 {strides = array<i32>} : memref<1x128xf32, #tpu.memory_space<vmem>>, vector<1x128xf32>,
    return
  }
  func.func @transform_0(%arg0: i32) -> (i32, i32) {
    %c0_i32 = arith.constant 0 : i32
    %c0_i32_0 = arith.constant 0 : i32
    return %arg0, %c0_i32 : i32, i32
  }
  func.func @transform_1(%arg0: i32) -> (i32, i32) {
    %c0_i32 = arith.constant 0 : i32
    %c0_i32_0 = arith.constant 0 : i32
    return %arg0, %c0_i32 : i32, i32
  }
  func.func @transform_2(%arg0: i32) -> (i32, i32) {
    %c0_i32 = arith.constant 0 : i32
    %c0_i32_0 = arith.constant 0 : i32
    return %arg0, %c0_i32 : i32, i32
  }
  func.func @transform_3(%arg0: i32) -> (i32, i32) {
    %c0_i32 = arith.constant 0 : i32
    %c0_i32_0 = arith.constant 0 : i32
    %c0_i32_1 = arith.constant 0 : i32
    return %c0_i32, %c0_i32_0 : i32, i32
  }
  func.func @transform_4(%arg0: i32) -> (i32, i32) {
    %c0_i32 = arith.constant 0 : i32
    %c0_i32_0 = arith.constant 0 : i32
    %c0_i32_1 = arith.constant 0 : i32
    return %c0_i32, %c0_i32_0 : i32, i32
  }
  func.func @transform_5(%arg0: i32) -> (i32, i32) {
    %c0_i32 = arith.constant 0 : i32
    %c0_i32_0 = arith.constant 0 : i32
    %c0_i32_1 = arith.constant 0 : i32
    return %c0_i32, %c0_i32_0 : i32, i32
  }
  func.func @transform_6(%arg0: i32) -> (i32, i32) {
    %c0_i32 = arith.constant 0 : i32
    %c0_i32_0 = arith.constant 0 : i32
    %c0_i32_1 = arith.constant 0 : i32
    return %c0_i32, %c0_i32_0 : i32, i32
  }
  func.func @transform_7(%arg0: i32) -> (i32, i32) {
    %c0_i32 = arith.constant 0 : i32
    %c0_i32_0 = arith.constant 0 : i32
    %c0_i32_1 = arith.constant 0 : i32
    return %c0_i32, %c0_i32_0 : i32, i32
  }
  func.func @transform_8(%arg0: i32) -> (i32, i32) {
    %c0_i32 = arith.constant 0 : i32
    %c0_i32_0 = arith.constant 0 : i32
    %c0_i32_1 = arith.constant 0 : i32
    return %c0_i32, %c0_i32_0 : i32, i32
  }
  func.func @transform_9(%arg0: i32) -> (i32, i32) {
    %c0_i32 = arith.constant 0 : i32
    %c0_i32_0 = arith.constant 0 : i32
    %c0_i32_1 = arith.constant 0 : i32
    return %c0_i32, %c0_i32_0 : i32, i32
  }
  func.func @transform_10(%arg0: i32) -> (i32, i32) {
    %c0_i32 = arith.constant 0 : i32
    %c0_i32_0 = arith.constant 0 : i32
    %c0_i32_1 = arith.constant 0 : i32
    return %c0_i32, %c0_i32_0 : i32, i32
  }
  func.func @transform_11(%arg0: i32) -> (i32, i32) {
    %c0_i32 = arith.constant 0 : i32
    %c0_i32_0 = arith.constant 0 : i32
    return %c0_i32, %arg0 : i32, i32
  }
}

</mosaic_0001>

<llo_original>
// kernel: tpu_custom_call.1
$region0: #{tpu_custom_call.1}
  #allocation0 [shape = 'u32[]', space=smem, size = 0x4, offset = 0x4, fixed_abs, tag = 'smem constant byte address 0x4 - core index']
  #allocation1 [shape = 'u32[144,128]{1,0:T(1,128)}', space=vmem, size = 0x12000, scoped, tag = 'internal scratch']
  #allocation2 [shape = 'f32[1,1]{1,0:T(1,128)S(6)}', space=smem, size = 0x200, scoped, tag = 'scoped memory for tpu_custom_call.1']
  %s0 = inlined_call_operand.vmem [shape: f32[128,8], index: 0, kind: input, shape index: {}]
  %s1 = inlined_call_operand.vmem [shape: f32[128,4], index: 1, kind: input, shape index: {}]
  %s2 = inlined_call_operand.vmem [shape: f32[128,8], index: 2, kind: input, shape index: {}]
  %s3 = inlined_call_operand.vmem [shape: f32[8,64], index: 3, kind: input, shape index: {}]
  %s4 = inlined_call_operand.vmem [shape: f32[4,64], index: 4, kind: input, shape index: {}]
  %s5 = inlined_call_operand.vmem [shape: f32[8,64], index: 5, kind: input, shape index: {}]
  %s6 = inlined_call_operand.vmem [shape: f32[1,64], index: 6, kind: input, shape index: {}]
  %s7 = inlined_call_operand.vmem [shape: f32[64,64], index: 7, kind: input, shape index: {}]
  %s8 = inlined_call_operand.vmem [shape: f32[1,64], index: 8, kind: input, shape index: {}]
  %s9 = inlined_call_operand.vmem [shape: f32[8,64], index: 9, kind: input, shape index: {}]
  %s10 = inlined_call_operand.<no memory space> [shape: f32[1,1], index: 10, kind: input, shape index: {}]
  %s11 = inlined_call_operand.hbm [shape: f32[1,128], index: 11, kind: output, shape index: {}]
  %s12 = sld [smem:[#allocation0]]
  $region54: #{tpu_custom_call.1} parent=0
    _
  %s14 = ssub.s32 1, %s12
  %s15 = scalar_select 0, %s14, %s12
  %16 = sst [smem:[#allocation2]] %s10
  $region1: #{tpu_custom_call.1} parent=0
    #allocation3 [shape = 'u8[512]{0}', space=vmem, size = 0x400, scoped, tag = 'output window, operand 0, single buffered']
    #allocation4 [shape = 's32[1]{0}', space=sflag, size = 0x4, scoped, tag = 'scoped memory for tpu_custom_call.1']
    %17 = vsyncpa [#allocation4], 0
    // Predicated region
    $region2: #{tpu_custom_call.1} parent=1 // pred_check
      _
    $region3: #{tpu_custom_call.1} parent=1 // pred_check_branch
      %19 = sbr.rel (0) target = $region5
    $region4: #{tpu_custom_call.1} parent=1 // pred_region
      _
    $region5: #{tpu_custom_call.1} parent=1 // pred_fallthru
      _
    // Predicated region
    $region6: #{tpu_custom_call.1} parent=1 // pred_check
      _
    $region7: #{tpu_custom_call.1} parent=1 // pred_check_branch
      %21 = sbr.rel (0) target = $region9
    $region8: #{tpu_custom_call.1} parent=1 // pred_region
      _
    $region9: #{tpu_custom_call.1} parent=1 // pred_fallthru
      _
    // Predicated region
    $region10: #{tpu_custom_call.1} parent=1 // pred_check
      _
    $region11: #{tpu_custom_call.1} parent=1 // pred_check_branch
      %23 = sbr.rel (0) target = $region13
    $region12: #{tpu_custom_call.1} parent=1 // pred_region
      _
    $region13: #{tpu_custom_call.1} parent=1 // pred_fallthru
      _
    // Predicated region
    $region14: #{tpu_custom_call.1} parent=1 // pred_check
      _
    $region15: #{tpu_custom_call.1} parent=1 // pred_check_branch
      %25 = sbr.rel (0) target = $region17
    $region16: #{tpu_custom_call.1} parent=1 // pred_region
      _
    $region17: #{tpu_custom_call.1} parent=1 // pred_fallthru
      _
    // Predicated region
    $region18: #{tpu_custom_call.1} parent=1 // pred_check
      _
    $region19: #{tpu_custom_call.1} parent=1 // pred_check_branch
      %27 = sbr.rel (0) target = $region21
    $region20: #{tpu_custom_call.1} parent=1 // pred_region
      _
    $region21: #{tpu_custom_call.1} parent=1 // pred_fallthru
      _
    // Predicated region
    $region22: #{tpu_custom_call.1} parent=1 // pred_check
      _
    $region23: #{tpu_custom_call.1} parent=1 // pred_check_branch
      %29 = sbr.rel (0) target = $region25
    $region24: #{tpu_custom_call.1} parent=1 // pred_region
      _
    $region25: #{tpu_custom_call.1} parent=1 // pred_fallthru
      _
    // Predicated region
    $region26: #{tpu_custom_call.1} parent=1 // pred_check
      _
    $region27: #{tpu_custom_call.1} parent=1 // pred_check_branch
      %31 = sbr.rel (0) target = $region29
    $region28: #{tpu_custom_call.1} parent=1 // pred_region
      _
    $region29: #{tpu_custom_call.1} parent=1 // pred_fallthru
      _
    // Predicated region
    $region30: #{tpu_custom_call.1} parent=1 // pred_check
      _
    $region31: #{tpu_custom_call.1} parent=1 // pred_check_branch
      %33 = sbr.rel (0) target = $region33
    $region32: #{tpu_custom_call.1} parent=1 // pred_region
      _
    $region33: #{tpu_custom_call.1} parent=1 // pred_fallthru
      _
    // Predicated region
    $region34: #{tpu_custom_call.1} parent=1 // pred_check
      _
    $region35: #{tpu_custom_call.1} parent=1 // pred_check_branch
      %35 = sbr.rel (0) target = $region37
    $region36: #{tpu_custom_call.1} parent=1 // pred_region
      _
    $region37: #{tpu_custom_call.1} parent=1 // pred_fallthru
      _
    // Predicated region
    $region38: #{tpu_custom_call.1} parent=1 // pred_check
      _
    $region39: #{tpu_custom_call.1} parent=1 // pred_check_branch
      %37 = sbr.rel (0) target = $region41
    $region40: #{tpu_custom_call.1} parent=1 // pred_region
      _
    $region41: #{tpu_custom_call.1} parent=1 // pred_fallthru
      _
    // Predicated region
    $region42: #{tpu_custom_call.1} parent=1 // pred_check
      _
    $region43: #{tpu_custom_call.1} parent=1 // pred_check_branch
      %39 = sbr.rel (0) target = $region45
    $region44: #{tpu_custom_call.1} parent=1 // pred_region
      _
    $region45: #{tpu_custom_call.1} parent=1 // pred_fallthru
      _
    %v40 = vld [vmem:[%s0] sm:$0xff]
    %v41 = vld [vmem:[%s0 + $0x8] sm:$0xff]
    %v42 = vld [vmem:[%s0 + $0x10] sm:$0xff]
    %v43 = vld [vmem:[%s0 + $0x18] sm:$0xff]
    %v44 = vld [vmem:[%s0 + $0x20] sm:$0xff]
    %v45 = vld [vmem:[%s0 + $0x28] sm:$0xff]
    %v46 = vld [vmem:[%s0 + $0x30] sm:$0xff]
    %v47 = vld [vmem:[%s0 + $0x38] sm:$0xff]
    %v48 = vld [vmem:[%s0 + $0x40] sm:$0xff]
    %v49 = vld [vmem:[%s0 + $0x48] sm:$0xff]
    %v50 = vld [vmem:[%s0 + $0x50] sm:$0xff]
    %v51 = vld [vmem:[%s0 + $0x58] sm:$0xff]
    %v52 = vld [vmem:[%s0 + $0x60] sm:$0xff]
    %v53 = vld [vmem:[%s0 + $0x68] sm:$0xff]
    %v54 = vld [vmem:[%s0 + $0x70] sm:$0xff]
    %v55 = vld [vmem:[%s0 + $0x78] sm:$0xff]
    %v56 = vld [vmem:[%s3] sm:$0xff]
    %v57 = vld [vmem:[%s1] sm:$0xff]
    %v58 = vld [vmem:[%s1 + $0x8] sm:$0xff]
    %v59 = vld [vmem:[%s1 + $0x10] sm:$0xff]
    %v60 = vld [vmem:[%s1 + $0x18] sm:$0xff]
    %v61 = vld [vmem:[%s1 + $0x20] sm:$0xff]
    %v62 = vld [vmem:[%s1 + $0x28] sm:$0xff]
    %v63 = vld [vmem:[%s1 + $0x30] sm:$0xff]
    %v64 = vld [vmem:[%s1 + $0x38] sm:$0xff]
    %v65 = vld [vmem:[%s1 + $0x40] sm:$0xff]
    %v66 = vld [vmem:[%s1 + $0x48] sm:$0xff]
    %v67 = vld [vmem:[%s1 + $0x50] sm:$0xff]
    %v68 = vld [vmem:[%s1 + $0x58] sm:$0xff]
    %v69 = vld [vmem:[%s1 + $0x60] sm:$0xff]
    %v70 = vld [vmem:[%s1 + $0x68] sm:$0xff]
    %v71 = vld [vmem:[%s1 + $0x70] sm:$0xff]
    %v72 = vld [vmem:[%s1 + $0x78] sm:$0xff]
    %v73 = vld [vmem:[%s4] sm:$0xf]
    %vm74 = vcmask 31744
    %v76 = vsel %vm74, %v57, 0
    %v79 = vsel %vm74, %v58, 0
    %v82 = vsel %vm74, %v59, 0
    %v85 = vsel %vm74, %v60, 0
    %v88 = vsel %vm74, %v61, 0
    %v91 = vsel %vm74, %v62, 0
    %v94 = vsel %vm74, %v63, 0
    %v97 = vsel %vm74, %v64, 0
    %v100 = vsel %vm74, %v65, 0
    %v103 = vsel %vm74, %v66, 0
    %v106 = vsel %vm74, %v67, 0
    %v109 = vsel %vm74, %v68, 0
    %v112 = vsel %vm74, %v69, 0
    %v115 = vsel %vm74, %v70, 0
    %v118 = vsel %vm74, %v71, 0
    %v121 = vsel %vm74, %v72, 0
    %vm123 = vcmask 1043456
    %v125 = vsel %vm123, %v73, 0
    %127 = vmatprep.subr.mxu0 0.0
    %128 = vmatpush1.msra.mxu0 %v125
    %129 = vmatprep.subr.mxu0 0.0
    %130 = vmatpush1.msra.mxu0 0.0
    %131 = vmatprep.subr.mxu0 0.0
    %132 = vmatpush1.msra.mxu0 0.0
    %133 = vmatprep.subr.mxu0 0.0
    %134 = vmatpush1.msra.mxu0 0.0
    %135 = vmatprep.subr.mxu0 0.0
    %136 = vmatpush1.msra.mxu0 0.0
    %137 = vmatprep.subr.mxu0 0.0
    %138 = vmatpush1.msra.mxu0 0.0
    %139 = vmatprep.subr.mxu0 0.0
    %140 = vmatpush1.msra.mxu0 0.0
    %141 = vmatprep.subr.mxu0 0.0
    %142 = vmatpush1.msra.mxu0 0.0
    %143 = vmatprep.subr.mxu0 0.0
    %144 = vmatpush1.msra.mxu0 0.0
    %145 = vmatprep.subr.mxu0 0.0
    %146 = vmatpush1.msra.mxu0 0.0
    %147 = vmatprep.subr.mxu0 0.0
    %148 = vmatpush1.msra.mxu0 0.0
    %149 = vmatprep.subr.mxu0 0.0
    %150 = vmatpush1.msra.mxu0 0.0
    %151 = vmatprep.subr.mxu0 0.0
    %152 = vmatpush1.msra.mxu0 0.0
    %153 = vmatprep.subr.mxu0 0.0
    %154 = vmatpush1.msra.mxu0 0.0
    %155 = vmatprep.subr.mxu0 0.0
    %156 = vmatpush1.msra.mxu0 0.0
    %157 = vmatprep.subr.mxu0 0.0
    %158 = vmatpush1.msra.mxu0 0.0
    %159 = vmatprep.subr.mxu0 0.0
    %160 = vmatpush1.msra.mxu0 0.0
    %161 = vmatprep.subr.mxu0 0.0
    %162 = vmatpush1.msra.mxu0 0.0
    %163 = vmatprep.subr.mxu0 0.0
    %164 = vmatpush1.msra.mxu0 0.0
    %165 = vmatprep.subr.mxu0 0.0
    %166 = vmatpush1.msra.mxu0 0.0
    %167 = vmatprep.subr.mxu0 0.0
    %168 = vmatpush1.msra.mxu0 0.0
    %169 = vmatprep.subr.mxu0 0.0
    %170 = vmatpush1.msra.mxu0 0.0
    %171 = vmatprep.subr.mxu0 0.0
    %172 = vmatpush1.msra.mxu0 0.0
    %173 = vmatprep.subr.mxu0 0.0
    %174 = vmatpush1.msra.mxu0 0.0
    %175 = vmatprep.subr.mxu0 0.0
    %176 = vmatpush1.msra.mxu0 0.0
    %177 = vmatprep.subr.mxu0 0.0
    %178 = vmatpush1.msra.mxu0 0.0
    %179 = vmatprep.subr.mxu0 0.0
    %180 = vmatpush1.msra.mxu0 0.0
    %181 = vmatprep.subr.mxu0 0.0
    %182 = vmatpush1.msra.mxu0 0.0
    %183 = vmatprep.subr.mxu0 0.0
    %184 = vmatpush1.msra.mxu0 0.0
    %185 = vmatprep.subr.mxu0 0.0
    %186 = vmatpush1.msra.mxu0 0.0
    %187 = vmatprep.subr.mxu0 0.0
    %188 = vmatpush1.msra.mxu0 0.0
    %189 = vmatprep.subr.mxu0 0.0
    %190 = vmatpush1.msra.mxu0 0.0
    %191 = vmatprep.mubr.f32.mxu0 0.0
    %192 = vmatmul.mubr.f32.gmra.mrb[0].mxu0 %v76
    %v193 = vpop.f32.mrb[0].mxu0
    %v194 = vadd.f32 0.0, %v193
    %v195 = vpop.f32.mrb[0].mxu0
    %196 = vmatprep.mubr.f32.mxu0 0.0
    %197 = vmatmul.mubr.f32.gmra.mrb[0].mxu0 %v79
    %v198 = vpop.f32.mrb[0].mxu0
    %v199 = vadd.f32 0.0, %v198
    %v200 = vpop.f32.mrb[0].mxu0
    %201 = vmatprep.mubr.f32.mxu0 0.0
    %202 = vmatmul.mubr.f32.gmra.mrb[0].mxu0 %v82
    %v203 = vpop.f32.mrb[0].mxu0
    %v204 = vadd.f32 0.0, %v203
    %v205 = vpop.f32.mrb[0].mxu0
    %206 = vmatprep.mubr.f32.mxu0 0.0
    %207 = vmatmul.mubr.f32.gmra.mrb[0].mxu0 %v85
    %v208 = vpop.f32.mrb[0].mxu0
    %v209 = vadd.f32 0.0, %v208
    %v210 = vpop.f32.mrb[0].mxu0
    %211 = vmatprep.mubr.f32.mxu0 0.0
    %212 = vmatmul.mubr.f32.gmra.mrb[0].mxu0 %v88
    %v213 = vpop.f32.mrb[0].mxu0
    %v214 = vadd.f32 0.0, %v213
    %v215 = vpop.f32.mrb[0].mxu0
    %216 = vmatprep.mubr.f32.mxu0 0.0
    %217 = vmatmul.mubr.f32.gmra.mrb[0].mxu0 %v91
    %v218 = vpop.f32.mrb[0].mxu0
    %v219 = vadd.f32 0.0, %v218
    %v220 = vpop.f32.mrb[0].mxu0
    %221 = vmatprep.mubr.f32.mxu0 0.0
    %222 = vmatmul.mubr.f32.gmra.mrb[0].mxu0 %v94
    %v223 = vpop.f32.mrb[0].mxu0
    %v224 = vadd.f32 0.0, %v223
    %v225 = vpop.f32.mrb[0].mxu0
    %226 = vmatprep.mubr.f32.mxu0 0.0
    %227 = vmatmul.mubr.f32.gmra.mrb[0].mxu0 %v97
    %v228 = vpop.f32.mrb[0].mxu0
    %v229 = vadd.f32 0.0, %v228
    %v230 = vpop.f32.mrb[0].mxu0
    %231 = vmatprep.mubr.f32.mxu0 0.0
    %232 = vmatmul.mubr.f32.gmra.mrb[0].mxu0 %v100
    %v233 = vpop.f32.mrb[0].mxu0
    %v234 = vadd.f32 0.0, %v233
    %v235 = vpop.f32.mrb[0].mxu0
    %236 = vmatprep.mubr.f32.mxu0 0.0
    %237 = vmatmul.mubr.f32.gmra.mrb[0].mxu0 %v103
    %v238 = vpop.f32.mrb[0].mxu0
    %v239 = vadd.f32 0.0, %v238
    %v240 = vpop.f32.mrb[0].mxu0
    %241 = vmatprep.mubr.f32.mxu0 0.0
    %242 = vmatmul.mubr.f32.gmra.mrb[0].mxu0 %v106
    %v243 = vpop.f32.mrb[0].mxu0
    %v244 = vadd.f32 0.0, %v243
    %v245 = vpop.f32.mrb[0].mxu0
    %246 = vmatprep.mubr.f32.mxu0 0.0
    %247 = vmatmul.mubr.f32.gmra.mrb[0].mxu0 %v109
    %v248 = vpop.f32.mrb[0].mxu0
    %v249 = vadd.f32 0.0, %v248
    %v250 = vpop.f32.mrb[0].mxu0
    %251 = vmatprep.mubr.f32.mxu0 0.0
    %252 = vmatmul.mubr.f32.gmra.mrb[0].mxu0 %v112
    %v253 = vpop.f32.mrb[0].mxu0
    %v254 = vadd.f32 0.0, %v253
    %v255 = vpop.f32.mrb[0].mxu0
    %256 = vmatprep.mubr.f32.mxu0 0.0
    %257 = vmatmul.mubr.f32.gmra.mrb[0].mxu0 %v115
    %v258 = vpop.f32.mrb[0].mxu0
    %v259 = vadd.f32 0.0, %v258
    %v260 = vpop.f32.mrb[0].mxu0
    %261 = vmatprep.mubr.f32.mxu0 0.0
    %262 = vmatmul.mubr.f32.gmra.mrb[0].mxu0 %v118
    %v263 = vpop.f32.mrb[0].mxu0
    %v264 = vadd.f32 0.0, %v263
    %v265 = vpop.f32.mrb[0].mxu0
    %266 = vmatprep.mubr.f32.mxu0 0.0
    %267 = vmatmul.mubr.f32.gmra.mrb[0].mxu0 %v121
    %v268 = vpop.f32.mrb[0].mxu0
    %v269 = vadd.f32 0.0, %v268
    %v270 = vpop.f32.mrb[0].mxu0
    %271 = vdwg.mxu0
    %vm272 = vcmask 64512
    %v274 = vsel %vm272, %v40, 0
    %v277 = vsel %vm272, %v41, 0
    %v280 = vsel %vm272, %v42, 0
    %v283 = vsel %vm272, %v43, 0
    %v286 = vsel %vm272, %v44, 0
    %v289 = vsel %vm272, %v45, 0
    %v292 = vsel %vm272, %v46, 0
    %v295 = vsel %vm272, %v47, 0
    %v298 = vsel %vm272, %v48, 0
    %v301 = vsel %vm272, %v49, 0
    %v304 = vsel %vm272, %v50, 0
    %v307 = vsel %vm272, %v51, 0
    %v310 = vsel %vm272, %v52, 0
    %v313 = vsel %vm272, %v53, 0
    %v316 = vsel %vm272, %v54, 0
    %v319 = vsel %vm272, %v55, 0
    %321 = vmatprep.subr.mxu0 0.0
    %322 = vmatpush1.msra.mxu0 %v56
    %323 = vmatprep.subr.mxu0 0.0
    %324 = vmatpush1.msra.mxu0 0.0
    %325 = vmatprep.subr.mxu0 0.0
    %326 = vmatpush1.msra.mxu0 0.0
    %327 = vmatprep.subr.mxu0 0.0
    %328 = vmatpush1.msra.mxu0 0.0
    %329 = vmatprep.subr.mxu0 0.0
    %330 = vmatpush1.msra.mxu0 0.0
    %331 = vmatprep.subr.mxu0 0.0
    %332 = vmatpush1.msra.mxu0 0.0
    %333 = vmatprep.subr.mxu0 0.0
    %334 = vmatpush1.msra.mxu0 0.0
    %335 = vmatprep.subr.mxu0 0.0
    %336 = vmatpush1.msra.mxu0 0.0
    %337 = vmatprep.subr.mxu0 0.0
    %338 = vmatpush1.msra.mxu0 0.0
    %339 = vmatprep.subr.mxu0 0.0
    %340 = vmatpush1.msra.mxu0 0.0
    %341 = vmatprep.subr.mxu0 0.0
    %342 = vmatpush1.msra.mxu0 0.0
    %343 = vmatprep.subr.mxu0 0.0
    %344 = vmatpush1.msra.mxu0 0.0
    %345 = vmatprep.subr.mxu0 0.0
    %346 = vmatpush1.msra.mxu0 0.0
    %347 = vmatprep.subr.mxu0 0.0
    %348 = vmatpush1.msra.mxu0 0.0
    %349 = vmatprep.subr.mxu0 0.0
    %350 = vmatpush1.msra.mxu0 0.0
    %351 = vmatprep.subr.mxu0 0.0
    %352 = vmatpush1.msra.mxu0 0.0
    %353 = vmatprep.subr.mxu0 0.0
    %354 = vmatpush1.msra.mxu0 0.0
    %355 = vmatprep.subr.mxu0 0.0
    %356 = vmatpush1.msra.mxu0 0.0
    %357 = vmatprep.subr.mxu0 0.0
    %358 = vmatpush1.msra.mxu0 0.0
    %359 = vmatprep.subr.mxu0 0.0
    %360 = vmatpush1.msra.mxu0 0.0
    %361 = vmatprep.subr.mxu0 0.0
    %362 = vmatpush1.msra.mxu0 0.0
    %363 = vmatprep.subr.mxu0 0.0
    %364 = vmatpush1.msra.mxu0 0.0
    %365 = vmatprep.subr.mxu0 0.0
    %366 = vmatpush1.msra.mxu0 0.0
    %367 = vmatprep.subr.mxu0 0.0
    %368 = vmatpush1.msra.mxu0 0.0
    %369 = vmatprep.subr.mxu0 0.0
    %370 = vmatpush1.msra.mxu0 0.0
    %371 = vmatprep.subr.mxu0 0.0
    %372 = vmatpush1.msra.mxu0 0.0
    %373 = vmatprep.subr.mxu0 0.0
    %374 = vmatpush1.msra.mxu0 0.0
    %375 = vmatprep.subr.mxu0 0.0
    %376 = vmatpush1.msra.mxu0 0.0
    %377 = vmatprep.subr.mxu0 0.0
    %378 = vmatpush1.msra.mxu0 0.0
    %379 = vmatprep.subr.mxu0 0.0
    %380 = vmatpush1.msra.mxu0 0.0
    %381 = vmatprep.subr.mxu0 0.0
    %382 = vmatpush1.msra.mxu0 0.0
    %383 = vmatprep.subr.mxu0 0.0
    %384 = vmatpush1.msra.mxu0 0.0
    %385 = vmatprep.mubr.f32.mxu0 0.0
    %386 = vmatmul.mubr.f32.gmra.mrb[0].mxu0 %v274
    %v387 = vpop.f32.mrb[0].mxu0
    %v388 = vadd.f32 %v194, %v387
    %v389 = vpop.f32.mrb[0].mxu0
    %390 = vmatprep.mubr.f32.mxu0 0.0
    %391 = vmatmul.mubr.f32.gmra.mrb[0].mxu0 %v277
    %v392 = vpop.f32.mrb[0].mxu0
    %v393 = vadd.f32 %v199, %v392
    %v394 = vpop.f32.mrb[0].mxu0
    %395 = vmatprep.mubr.f32.mxu0 0.0
    %396 = vmatmul.mubr.f32.gmra.mrb[0].mxu0 %v280
    %v397 = vpop.f32.mrb[0].mxu0
    %v398 = vadd.f32 %v204, %v397
    %v399 = vpop.f32.mrb[0].mxu0
    %400 = vmatprep.mubr.f32.mxu0 0.0
    %401 = vmatmul.mubr.f32.gmra.mrb[0].mxu0 %v283
    %v402 = vpop.f32.mrb[0].mxu0
    %v403 = vadd.f32 %v209, %v402
    %v404 = vpop.f32.mrb[0].mxu0
    %405 = vmatprep.mubr.f32.mxu0 0.0
    %406 = vmatmul.mubr.f32.gmra.mrb[0].mxu0 %v286
    %v407 = vpop.f32.mrb[0].mxu0
    %v408 = vadd.f32 %v214, %v407
    %v409 = vpop.f32.mrb[0].mxu0
    %410 = vmatprep.mubr.f32.mxu0 0.0
    %411 = vmatmul.mubr.f32.gmra.mrb[0].mxu0 %v289
    %v412 = vpop.f32.mrb[0].mxu0
    %v413 = vadd.f32 %v219, %v412
    %v414 = vpop.f32.mrb[0].mxu0
    %415 = vmatprep.mubr.f32.mxu0 0.0
    %416 = vmatmul.mubr.f32.gmra.mrb[0].mxu0 %v292
    %v417 = vpop.f32.mrb[0].mxu0
    %v418 = vadd.f32 %v224, %v417
    %v419 = vpop.f32.mrb[0].mxu0
    %420 = vmatprep.mubr.f32.mxu0 0.0
    %421 = vmatmul.mubr.f32.gmra.mrb[0].mxu0 %v295
    %v422 = vpop.f32.mrb[0].mxu0
    %v423 = vadd.f32 %v229, %v422
    %v424 = vpop.f32.mrb[0].mxu0
    %425 = vmatprep.mubr.f32.mxu0 0.0
    %426 = vmatmul.mubr.f32.gmra.mrb[0].mxu0 %v298
    %v427 = vpop.f32.mrb[0].mxu0
    %v428 = vadd.f32 %v234, %v427
    %v429 = vpop.f32.mrb[0].mxu0
    %430 = vmatprep.mubr.f32.mxu0 0.0
    %431 = vmatmul.mubr.f32.gmra.mrb[0].mxu0 %v301
    %v432 = vpop.f32.mrb[0].mxu0
    %v433 = vadd.f32 %v239, %v432
    %v434 = vpop.f32.mrb[0].mxu0
    %435 = vmatprep.mubr.f32.mxu0 0.0
    %436 = vmatmul.mubr.f32.gmra.mrb[0].mxu0 %v304
    %v437 = vpop.f32.mrb[0].mxu0
    %v438 = vadd.f32 %v244, %v437
    %v439 = vpop.f32.mrb[0].mxu0
    %440 = vmatprep.mubr.f32.mxu0 0.0
    %441 = vmatmul.mubr.f32.gmra.mrb[0].mxu0 %v307
    %v442 = vpop.f32.mrb[0].mxu0
    %v443 = vadd.f32 %v249, %v442
    %v444 = vpop.f32.mrb[0].mxu0
    %445 = vmatprep.mubr.f32.mxu0 0.0
    %446 = vmatmul.mubr.f32.gmra.mrb[0].mxu0 %v310
    %v447 = vpop.f32.mrb[0].mxu0
    %v448 = vadd.f32 %v254, %v447
    %v449 = vpop.f32.mrb[0].mxu0
    %450 = vmatprep.mubr.f32.mxu0 0.0
    %451 = vmatmul.mubr.f32.gmra.mrb[0].mxu0 %v313
    %v452 = vpop.f32.mrb[0].mxu0
    %v453 = vadd.f32 %v259, %v452
    %v454 = vpop.f32.mrb[0].mxu0
    %455 = vmatprep.mubr.f32.mxu0 0.0
    %456 = vmatmul.mubr.f32.gmra.mrb[0].mxu0 %v316
    %v457 = vpop.f32.mrb[0].mxu0
    %v458 = vadd.f32 %v264, %v457
    %v459 = vpop.f32.mrb[0].mxu0
    %460 = vmatprep.mubr.f32.mxu0 0.0
    %461 = vmatmul.mubr.f32.gmra.mrb[0].mxu0 %v319
    %v462 = vpop.f32.mrb[0].mxu0
    %v463 = vadd.f32 %v269, %v462
    %v464 = vpop.f32.mrb[0].mxu0
    %465 = vdwg.mxu0
    %v466 = vld [vmem:[%s2] sm:$0xff]
    %v467 = vld [vmem:[%s2 + $0x8] sm:$0xff]
    %v468 = vld [vmem:[%s2 + $0x10] sm:$0xff]
    %v469 = vld [vmem:[%s2 + $0x18] sm:$0xff]
    %v470 = vld [vmem:[%s2 + $0x20] sm:$0xff]
    %v471 = vld [vmem:[%s2 + $0x28] sm:$0xff]
    %v472 = vld [vmem:[%s2 + $0x30] sm:$0xff]
    %v473 = vld [vmem:[%s2 + $0x38] sm:$0xff]
    %v474 = vld [vmem:[%s2 + $0x40] sm:$0xff]
    %v475 = vld [vmem:[%s2 + $0x48] sm:$0xff]
    %v476 = vld [vmem:[%s2 + $0x50] sm:$0xff]
    %v477 = vld [vmem:[%s2 + $0x58] sm:$0xff]
    %v478 = vld [vmem:[%s2 + $0x60] sm:$0xff]
    %v479 = vld [vmem:[%s2 + $0x68] sm:$0xff]
    %v480 = vld [vmem:[%s2 + $0x70] sm:$0xff]
    %v481 = vld [vmem:[%s2 + $0x78] sm:$0xff]
    %v482 = vld [vmem:[%s5] sm:$0xff]
    %v484 = vsel %vm272, %v466, 0
    %v487 = vsel %vm272, %v467, 0
    %v490 = vsel %vm272, %v468, 0
    %v493 = vsel %vm272, %v469, 0
    %v496 = vsel %vm272, %v470, 0
    %v499 = vsel %vm272, %v471, 0
    %v502 = vsel %vm272, %v472, 0
    %v505 = vsel %vm272, %v473, 0
    %v508 = vsel %vm272, %v474, 0
    %v511 = vsel %vm272, %v475, 0
    %v514 = vsel %vm272, %v476, 0
    %v517 = vsel %vm272, %v477, 0
    %v520 = vsel %vm272, %v478, 0
    %v523 = vsel %vm272, %v479, 0
    %v526 = vsel %vm272, %v480, 0
    %v529 = vsel %vm272, %v481, 0
    %531 = vmatprep.subr.mxu0 0.0
    %532 = vmatpush1.msra.mxu0 %v482
    %533 = vmatprep.subr.mxu0 0.0
    %534 = vmatpush1.msra.mxu0 0.0
    %535 = vmatprep.subr.mxu0 0.0
    %536 = vmatpush1.msra.mxu0 0.0
    %537 = vmatprep.subr.mxu0 0.0
    %538 = vmatpush1.msra.mxu0 0.0
    %539 = vmatprep.subr.mxu0 0.0
    %540 = vmatpush1.msra.mxu0 0.0
    %541 = vmatprep.subr.mxu0 0.0
    %542 = vmatpush1.msra.mxu0 0.0
    %543 = vmatprep.subr.mxu0 0.0
    %544 = vmatpush1.msra.mxu0 0.0
    %545 = vmatprep.subr.mxu0 0.0
    %546 = vmatpush1.msra.mxu0 0.0
    %547 = vmatprep.subr.mxu0 0.0
    %548 = vmatpush1.msra.mxu0 0.0
    %549 = vmatprep.subr.mxu0 0.0
    %550 = vmatpush1.msra.mxu0 0.0
    %551 = vmatprep.subr.mxu0 0.0
    %552 = vmatpush1.msra.mxu0 0.0
    %553 = vmatprep.subr.mxu0 0.0
    %554 = vmatpush1.msra.mxu0 0.0
    %555 = vmatprep.subr.mxu0 0.0
    %556 = vmatpush1.msra.mxu0 0.0
    %557 = vmatprep.subr.mxu0 0.0
    %558 = vmatpush1.msra.mxu0 0.0
    %559 = vmatprep.subr.mxu0 0.0
    %560 = vmatpush1.msra.mxu0 0.0
    %561 = vmatprep.subr.mxu0 0.0
    %562 = vmatpush1.msra.mxu0 0.0
    %563 = vmatprep.subr.mxu0 0.0
    %564 = vmatpush1.msra.mxu0 0.0
    %565 = vmatprep.subr.mxu0 0.0
    %566 = vmatpush1.msra.mxu0 0.0
    %567 = vmatprep.subr.mxu0 0.0
    %568 = vmatpush1.msra.mxu0 0.0
    %569 = vmatprep.subr.mxu0 0.0
    %570 = vmatpush1.msra.mxu0 0.0
    %571 = vmatprep.subr.mxu0 0.0
    %572 = vmatpush1.msra.mxu0 0.0
    %573 = vmatprep.subr.mxu0 0.0
    %574 = vmatpush1.msra.mxu0 0.0
    %575 = vmatprep.subr.mxu0 0.0
    %576 = vmatpush1.msra.mxu0 0.0
    %577 = vmatprep.subr.mxu0 0.0
    %578 = vmatpush1.msra.mxu0 0.0
    %579 = vmatprep.subr.mxu0 0.0
    %580 = vmatpush1.msra.mxu0 0.0
    %581 = vmatprep.subr.mxu0 0.0
    %582 = vmatpush1.msra.mxu0 0.0
    %583 = vmatprep.subr.mxu0 0.0
    %584 = vmatpush1.msra.mxu0 0.0
    %585 = vmatprep.subr.mxu0 0.0
    %586 = vmatpush1.msra.mxu0 0.0
    %587 = vmatprep.subr.mxu0 0.0
    %588 = vmatpush1.msra.mxu0 0.0
    %589 = vmatprep.subr.mxu0 0.0
    %590 = vmatpush1.msra.mxu0 0.0
    %591 = vmatprep.subr.mxu0 0.0
    %592 = vmatpush1.msra.mxu0 0.0
    %593 = vmatprep.subr.mxu0 0.0
    %594 = vmatpush1.msra.mxu0 0.0
    %595 = vmatprep.mubr.f32.mxu0 0.0
    %596 = vmatmul.mubr.f32.gmra.mrb[0].mxu0 %v484
    %v597 = vpop.f32.mrb[0].mxu0
    %v598 = vadd.f32 0.0, %v597
    %v599 = vpop.f32.mrb[0].mxu0
    %600 = vmatprep.mubr.f32.mxu0 0.0
    %601 = vmatmul.mubr.f32.gmra.mrb[0].mxu0 %v487
    %v602 = vpop.f32.mrb[0].mxu0
    %v603 = vadd.f32 0.0, %v602
    %v604 = vpop.f32.mrb[0].mxu0
    %605 = vmatprep.mubr.f32.mxu0 0.0
    %606 = vmatmul.mubr.f32.gmra.mrb[0].mxu0 %v490
    %v607 = vpop.f32.mrb[0].mxu0
    %v608 = vadd.f32 0.0, %v607
    %v609 = vpop.f32.mrb[0].mxu0
    %610 = vmatprep.mubr.f32.mxu0 0.0
    %611 = vmatmul.mubr.f32.gmra.mrb[0].mxu0 %v493
    %v612 = vpop.f32.mrb[0].mxu0
    %v613 = vadd.f32 0.0, %v612
    %v614 = vpop.f32.mrb[0].mxu0
    %615 = vmatprep.mubr.f32.mxu0 0.0
    %616 = vmatmul.mubr.f32.gmra.mrb[0].mxu0 %v496
    %v617 = vpop.f32.mrb[0].mxu0
    %v618 = vadd.f32 0.0, %v617
    %v619 = vpop.f32.mrb[0].mxu0
    %620 = vmatprep.mubr.f32.mxu0 0.0
    %621 = vmatmul.mubr.f32.gmra.mrb[0].mxu0 %v499
    %v622 = vpop.f32.mrb[0].mxu0
    %v623 = vadd.f32 0.0, %v622
    %v624 = vpop.f32.mrb[0].mxu0
    %625 = vmatprep.mubr.f32.mxu0 0.0
    %626 = vmatmul.mubr.f32.gmra.mrb[0].mxu0 %v502
    %v627 = vpop.f32.mrb[0].mxu0
    %v628 = vadd.f32 0.0, %v627
    %v629 = vpop.f32.mrb[0].mxu0
    %630 = vmatprep.mubr.f32.mxu0 0.0
    %631 = vmatmul.mubr.f32.gmra.mrb[0].mxu0 %v505
    %v632 = vpop.f32.mrb[0].mxu0
    %v633 = vadd.f32 0.0, %v632
    %v634 = vpop.f32.mrb[0].mxu0
    %635 = vmatprep.mubr.f32.mxu0 0.0
    %636 = vmatmul.mubr.f32.gmra.mrb[0].mxu0 %v508
    %v637 = vpop.f32.mrb[0].mxu0
    %v638 = vadd.f32 0.0, %v637
    %v639 = vpop.f32.mrb[0].mxu0
    %640 = vmatprep.mubr.f32.mxu0 0.0
    %641 = vmatmul.mubr.f32.gmra.mrb[0].mxu0 %v511
    %v642 = vpop.f32.mrb[0].mxu0
    %v643 = vadd.f32 0.0, %v642
    %v644 = vpop.f32.mrb[0].mxu0
    %645 = vmatprep.mubr.f32.mxu0 0.0
    %646 = vmatmul.mubr.f32.gmra.mrb[0].mxu0 %v514
    %v647 = vpop.f32.mrb[0].mxu0
    %v648 = vadd.f32 0.0, %v647
    %v649 = vpop.f32.mrb[0].mxu0
    %650 = vmatprep.mubr.f32.mxu0 0.0
    %651 = vmatmul.mubr.f32.gmra.mrb[0].mxu0 %v517
    %v652 = vpop.f32.mrb[0].mxu0
    %v653 = vadd.f32 0.0, %v652
    %v654 = vpop.f32.mrb[0].mxu0
    %655 = vmatprep.mubr.f32.mxu0 0.0
    %656 = vmatmul.mubr.f32.gmra.mrb[0].mxu0 %v520
    %v657 = vpop.f32.mrb[0].mxu0
    %v658 = vadd.f32 0.0, %v657
    %v659 = vpop.f32.mrb[0].mxu0
    %660 = vmatprep.mubr.f32.mxu0 0.0
    %661 = vmatmul.mubr.f32.gmra.mrb[0].mxu0 %v523
    %v662 = vpop.f32.mrb[0].mxu0
    %v663 = vadd.f32 0.0, %v662
    %v664 = vpop.f32.mrb[0].mxu0
    %665 = vmatprep.mubr.f32.mxu0 0.0
    %666 = vmatmul.mubr.f32.gmra.mrb[0].mxu0 %v526
    %v667 = vpop.f32.mrb[0].mxu0
    %v668 = vadd.f32 0.0, %v667
    %v669 = vpop.f32.mrb[0].mxu0
    %670 = vmatprep.mubr.f32.mxu0 0.0
    %671 = vmatmul.mubr.f32.gmra.mrb[0].mxu0 %v529
    %v672 = vpop.f32.mrb[0].mxu0
    %v673 = vadd.f32 0.0, %v672
    %v674 = vpop.f32.mrb[0].mxu0
    %675 = vdwg.mxu0
    %v676 = vadd.f32 %v388, %v598
    %v677 = vadd.f32 %v393, %v603
    %v678 = vadd.f32 %v398, %v608
    %v679 = vadd.f32 %v403, %v613
    %v680 = vadd.f32 %v408, %v618
    %v681 = vadd.f32 %v413, %v623
    %v682 = vadd.f32 %v418, %v628
    %v683 = vadd.f32 %v423, %v633
    %v684 = vadd.f32 %v428, %v638
    %v685 = vadd.f32 %v433, %v643
    %v686 = vadd.f32 %v438, %v648
    %v687 = vadd.f32 %v443, %v653
    %v688 = vadd.f32 %v448, %v658
    %v689 = vadd.f32 %v453, %v663
    %v690 = vadd.f32 %v458, %v668
    %v691 = vadd.f32 %v463, %v673
    %v692 = vld [vmem:[%s6] sm:$0x1]
    %v694 = vlaneseq
    %v695 = vshrl.u32 %v694, 7
    %v696 = vsub.s32 0, %v695
    %v697 = vrot.slane %v692, %v696
    %v699 = vadd.f32 %v676, %v697
    %v700 = vadd.f32 %v677, %v697
    %v701 = vadd.f32 %v678, %v697
    %v702 = vadd.f32 %v679, %v697
    %v703 = vadd.f32 %v680, %v697
    %v704 = vadd.f32 %v681, %v697
    %v705 = vadd.f32 %v682, %v697
    %v706 = vadd.f32 %v683, %v697
    %v707 = vadd.f32 %v684, %v697
    %v708 = vadd.f32 %v685, %v697
    %v709 = vadd.f32 %v686, %v697
    %v710 = vadd.f32 %v687, %v697
    %v711 = vadd.f32 %v688, %v697
    %v712 = vadd.f32 %v689, %v697
    %v713 = vadd.f32 %v690, %v697
    %v714 = vadd.f32 %v691, %v697
    %v715 = vmax.f32 %v699, 0.0
    %v716 = vmax.f32 %v700, 0.0
    %v717 = vmax.f32 %v701, 0.0
    %v718 = vmax.f32 %v702, 0.0
    %v719 = vmax.f32 %v703, 0.0
    %v720 = vmax.f32 %v704, 0.0
    %v721 = vmax.f32 %v705, 0.0
    %v722 = vmax.f32 %v706, 0.0
    %v723 = vmax.f32 %v707, 0.0
    %v724 = vmax.f32 %v708, 0.0
    %v725 = vmax.f32 %v709, 0.0
    %v726 = vmax.f32 %v710, 0.0
    %v727 = vmax.f32 %v711, 0.0
    %v728 = vmax.f32 %v712, 0.0
    %v729 = vmax.f32 %v713, 0.0
    %v730 = vmax.f32 %v714, 0.0
    %v731 = vld [vmem:[%s7] sm:$0xff]
    %v732 = vld [vmem:[%s7 + $0x8] sm:$0xff]
    %v733 = vld [vmem:[%s7 + $0x10] sm:$0xff]
    %v734 = vld [vmem:[%s7 + $0x18] sm:$0xff]
    %v735 = vld [vmem:[%s7 + $0x20] sm:$0xff]
    %v736 = vld [vmem:[%s7 + $0x28] sm:$0xff]
    %v737 = vld [vmem:[%s7 + $0x30] sm:$0xff]
    %v738 = vld [vmem:[%s7 + $0x38] sm:$0xff]
    %v739 = vld [vmem:[%s8] sm:$0x1]
    %v741 = vlaneseq
    %v742 = vshrl.u32 %v741, 7
    %v743 = vsub.s32 0, %v742
    %v744 = vrot.slane %v739, %v743
    %vm746 = vcmask 523264
    %v748 = vsel %vm746, %v715, 0
    %v751 = vsel %vm746, %v716, 0
    %v754 = vsel %vm746, %v717, 0
    %v757 = vsel %vm746, %v718, 0
    %v760 = vsel %vm746, %v719, 0
    %v763 = vsel %vm746, %v720, 0
    %v766 = vsel %vm746, %v721, 0
    %v769 = vsel %vm746, %v722, 0
    %v772 = vsel %vm746, %v723, 0
    %v775 = vsel %vm746, %v724, 0
    %v778 = vsel %vm746, %v725, 0
    %v781 = vsel %vm746, %v726, 0
    %v784 = vsel %vm746, %v727, 0
    %v787 = vsel %vm746, %v728, 0
    %v790 = vsel %vm746, %v729, 0
    %v793 = vsel %vm746, %v730, 0
    %795 = vmatprep.subr.mxu0 0.0
    %796 = vmatpush1.msra.mxu0 %v731
    %797 = vmatprep.subr.mxu0 0.0
    %798 = vmatpush1.msra.mxu0 %v732
    %799 = vmatprep.subr.mxu0 0.0
    %800 = vmatpush1.msra.mxu0 %v733
    %801 = vmatprep.subr.mxu0 0.0
    %802 = vmatpush1.msra.mxu0 %v734
    %803 = vmatprep.subr.mxu0 0.0
    %804 = vmatpush1.msra.mxu0 %v735
    %805 = vmatprep.subr.mxu0 0.0
    %806 = vmatpush1.msra.mxu0 %v736
    %807 = vmatprep.subr.mxu0 0.0
    %808 = vmatpush1.msra.mxu0 %v737
    %809 = vmatprep.subr.mxu0 0.0
    %810 = vmatpush1.msra.mxu0 %v738
    %811 = vmatprep.subr.mxu0 0.0
    %812 = vmatpush1.msra.mxu0 0.0
    %813 = vmatprep.subr.mxu0 0.0
    %814 = vmatpush1.msra.mxu0 0.0
    %815 = vmatprep.subr.mxu0 0.0
    %816 = vmatpush1.msra.mxu0 0.0
    %817 = vmatprep.subr.mxu0 0.0
    %818 = vmatpush1.msra.mxu0 0.0
    %819 = vmatprep.subr.mxu0 0.0
    %820 = vmatpush1.msra.mxu0 0.0
    %821 = vmatprep.subr.mxu0 0.0
    %822 = vmatpush1.msra.mxu0 0.0
    %823 = vmatprep.subr.mxu0 0.0
    %824 = vmatpush1.msra.mxu0 0.0
    %825 = vmatprep.subr.mxu0 0.0
    %826 = vmatpush1.msra.mxu0 0.0
    %827 = vmatprep.subr.mxu0 0.0
    %828 = vmatpush1.msra.mxu0 0.0
    %829 = vmatprep.subr.mxu0 0.0
    %830 = vmatpush1.msra.mxu0 0.0
    %831 = vmatprep.subr.mxu0 0.0
    %832 = vmatpush1.msra.mxu0 0.0
    %833 = vmatprep.subr.mxu0 0.0
    %834 = vmatpush1.msra.mxu0 0.0
    %835 = vmatprep.subr.mxu0 0.0
    %836 = vmatpush1.msra.mxu0 0.0
    %837 = vmatprep.subr.mxu0 0.0
    %838 = vmatpush1.msra.mxu0 0.0
    %839 = vmatprep.subr.mxu0 0.0
    %840 = vmatpush1.msra.mxu0 0.0
    %841 = vmatprep.subr.mxu0 0.0
    %842 = vmatpush1.msra.mxu0 0.0
    %843 = vmatprep.subr.mxu0 0.0
    %844 = vmatpush1.msra.mxu0 0.0
    %845 = vmatprep.subr.mxu0 0.0
    %846 = vmatpush1.msra.mxu0 0.0
    %847 = vmatprep.subr.mxu0 0.0
    %848 = vmatpush1.msra.mxu0 0.0
    %849 = vmatprep.subr.mxu0 0.0
    %850 = vmatpush1.msra.mxu0 0.0
    %851 = vmatprep.subr.mxu0 0.0
    %852 = vmatpush1.msra.mxu0 0.0
    %853 = vmatprep.subr.mxu0 0.0
    %854 = vmatpush1.msra.mxu0 0.0
    %855 = vmatprep.subr.mxu0 0.0
    %856 = vmatpush1.msra.mxu0 0.0
    %857 = vmatprep.subr.mxu0 0.0
    %858 = vmatpush1.msra.mxu0 0.0
    %859 = vmatprep.mubr.f32.mxu0 0.0
    %860 = vmatmul.mubr.f32.gmra.mrb[0].mxu0 %v748
    %v861 = vpop.f32.mrb[0].mxu0
    %v862 = vadd.f32 %v744, %v861
    %v863 = vpop.f32.mrb[0].mxu0
    %864 = vmatprep.mubr.f32.mxu0 0.0
    %865 = vmatmul.mubr.f32.gmra.mrb[0].mxu0 %v751
    %v866 = vpop.f32.mrb[0].mxu0
    %v867 = vadd.f32 %v744, %v866
    %v868 = vpop.f32.mrb[0].mxu0
    %869 = vmatprep.mubr.f32.mxu0 0.0
    %870 = vmatmul.mubr.f32.gmra.mrb[0].mxu0 %v754
    %v871 = vpop.f32.mrb[0].mxu0
    %v872 = vadd.f32 %v744, %v871
    %v873 = vpop.f32.mrb[0].mxu0
    %874 = vmatprep.mubr.f32.mxu0 0.0
    %875 = vmatmul.mubr.f32.gmra.mrb[0].mxu0 %v757
    %v876 = vpop.f32.mrb[0].mxu0
    %v877 = vadd.f32 %v744, %v876
    %v878 = vpop.f32.mrb[0].mxu0
    %879 = vmatprep.mubr.f32.mxu0 0.0
    %880 = vmatmul.mubr.f32.gmra.mrb[0].mxu0 %v760
    %v881 = vpop.f32.mrb[0].mxu0
    %v882 = vadd.f32 %v744, %v881
    %v883 = vpop.f32.mrb[0].mxu0
    %884 = vmatprep.mubr.f32.mxu0 0.0
    %885 = vmatmul.mubr.f32.gmra.mrb[0].mxu0 %v763
    %v886 = vpop.f32.mrb[0].mxu0
    %v887 = vadd.f32 %v744, %v886
    %v888 = vpop.f32.mrb[0].mxu0
    %889 = vmatprep.mubr.f32.mxu0 0.0
    %890 = vmatmul.mubr.f32.gmra.mrb[0].mxu0 %v766
    %v891 = vpop.f32.mrb[0].mxu0
    %v892 = vadd.f32 %v744, %v891
    %v893 = vpop.f32.mrb[0].mxu0
    %894 = vmatprep.mubr.f32.mxu0 0.0
    %895 = vmatmul.mubr.f32.gmra.mrb[0].mxu0 %v769
    %v896 = vpop.f32.mrb[0].mxu0
    %v897 = vadd.f32 %v744, %v896
    %v898 = vpop.f32.mrb[0].mxu0
    %899 = vmatprep.mubr.f32.mxu0 0.0
    %900 = vmatmul.mubr.f32.gmra.mrb[0].mxu0 %v772
    %v901 = vpop.f32.mrb[0].mxu0
    %v902 = vadd.f32 %v744, %v901
    %v903 = vpop.f32.mrb[0].mxu0
    %904 = vmatprep.mubr.f32.mxu0 0.0
    %905 = vmatmul.mubr.f32.gmra.mrb[0].mxu0 %v775
    %v906 = vpop.f32.mrb[0].mxu0
    %v907 = vadd.f32 %v744, %v906
    %v908 = vpop.f32.mrb[0].mxu0
    %909 = vmatprep.mubr.f32.mxu0 0.0
    %910 = vmatmul.mubr.f32.gmra.mrb[0].mxu0 %v778
    %v911 = vpop.f32.mrb[0].mxu0
    %v912 = vadd.f32 %v744, %v911
    %v913 = vpop.f32.mrb[0].mxu0
    %914 = vmatprep.mubr.f32.mxu0 0.0
    %915 = vmatmul.mubr.f32.gmra.mrb[0].mxu0 %v781
    %v916 = vpop.f32.mrb[0].mxu0
    %v917 = vadd.f32 %v744, %v916
    %v918 = vpop.f32.mrb[0].mxu0
    %919 = vmatprep.mubr.f32.mxu0 0.0
    %920 = vmatmul.mubr.f32.gmra.mrb[0].mxu0 %v784
    %v921 = vpop.f32.mrb[0].mxu0
    %v922 = vadd.f32 %v744, %v921
    %v923 = vpop.f32.mrb[0].mxu0
    %924 = vmatprep.mubr.f32.mxu0 0.0
    %925 = vmatmul.mubr.f32.gmra.mrb[0].mxu0 %v787
    %v926 = vpop.f32.mrb[0].mxu0
    %v927 = vadd.f32 %v744, %v926
    %v928 = vpop.f32.mrb[0].mxu0
    %929 = vmatprep.mubr.f32.mxu0 0.0
    %930 = vmatmul.mubr.f32.gmra.mrb[0].mxu0 %v790
    %v931 = vpop.f32.mrb[0].mxu0
    %v932 = vadd.f32 %v744, %v931
    %v933 = vpop.f32.mrb[0].mxu0
    %934 = vmatprep.mubr.f32.mxu0 0.0
    %935 = vmatmul.mubr.f32.gmra.mrb[0].mxu0 %v793
    %v936 = vpop.f32.mrb[0].mxu0
    %v937 = vadd.f32 %v744, %v936
    %v938 = vpop.f32.mrb[0].mxu0
    %939 = vdwg.mxu0
    %v940 = vmax.f32 %v862, 0.0
    %v941 = vmax.f32 %v867, 0.0
    %v942 = vmax.f32 %v872, 0.0
    %v943 = vmax.f32 %v877, 0.0
    %v944 = vmax.f32 %v882, 0.0
    %v945 = vmax.f32 %v887, 0.0
    %v946 = vmax.f32 %v892, 0.0
    %v947 = vmax.f32 %v897, 0.0
    %v948 = vmax.f32 %v902, 0.0
    %v949 = vmax.f32 %v907, 0.0
    %v950 = vmax.f32 %v912, 0.0
    %v951 = vmax.f32 %v917, 0.0
    %v952 = vmax.f32 %v922, 0.0
    %v953 = vmax.f32 %v927, 0.0
    %v954 = vmax.f32 %v932, 0.0
    %v955 = vmax.f32 %v937, 0.0
    %v956 = vld [vmem:[%s9] sm:$0xff]
    %v958 = vsel %vm746, %v956, 0
    %v961 = vsel %vm746, %v940, 0
    %v964 = vsel %vm746, %v941, 0
    %v967 = vsel %vm746, %v942, 0
    %v970 = vsel %vm746, %v943, 0
    %v973 = vsel %vm746, %v944, 0
    %v976 = vsel %vm746, %v945, 0
    %v979 = vsel %vm746, %v946, 0
    %v982 = vsel %vm746, %v947, 0
    %v985 = vsel %vm746, %v948, 0
    %v988 = vsel %vm746, %v949, 0
    %v991 = vsel %vm746, %v950, 0
    %v994 = vsel %vm746, %v951, 0
    %v997 = vsel %vm746, %v952, 0
    %v1000 = vsel %vm746, %v953, 0
    %v1003 = vsel %vm746, %v954, 0
    %v1006 = vsel %vm746, %v955, 0
    %1008 = vmatprep.subr.mxu0 0.0
    %1009 = vmatpush1.xpose.msra.mxu0 %v961
    %1010 = vmatprep.subr.mxu0 0.0
    %1011 = vmatpush1.xpose.msra.mxu0 %v964
    %1012 = vmatprep.subr.mxu0 0.0
    %1013 = vmatpush1.xpose.msra.mxu0 %v967
    %1014 = vmatprep.subr.mxu0 0.0
    %1015 = vmatpush1.xpose.msra.mxu0 %v970
    %1016 = vmatprep.subr.mxu0 0.0
    %1017 = vmatpush1.xpose.msra.mxu0 %v973
    %1018 = vmatprep.subr.mxu0 0.0
    %1019 = vmatpush1.xpose.msra.mxu0 %v976
    %1020 = vmatprep.subr.mxu0 0.0
    %1021 = vmatpush1.xpose.msra.mxu0 %v979
    %1022 = vmatprep.subr.mxu0 0.0
    %1023 = vmatpush1.xpose.msra.mxu0 %v982
    %1024 = vmatprep.subr.mxu0 0.0
    %1025 = vmatpush1.xpose.msra.mxu0 %v985
    %1026 = vmatprep.subr.mxu0 0.0
    %1027 = vmatpush1.xpose.msra.mxu0 %v988
    %1028 = vmatprep.subr.mxu0 0.0
    %1029 = vmatpush1.xpose.msra.mxu0 %v991
    %1030 = vmatprep.subr.mxu0 0.0
    %1031 = vmatpush1.xpose.msra.mxu0 %v994
    %1032 = vmatprep.subr.mxu0 0.0
    %1033 = vmatpush1.xpose.msra.mxu0 %v997
    %1034 = vmatprep.subr.mxu0 0.0
    %1035 = vmatpush1.xpose.msra.mxu0 %v1000
    %1036 = vmatprep.subr.mxu0 0.0
    %1037 = vmatpush1.xpose.msra.mxu0 %v1003
    %1038 = vmatprep.subr.mxu0 0.0
    %1039 = vmatpush1.xpose.msra.mxu0 %v1006
    %1040 = vmatprep.subr.mxu0 0.0
    %1041 = vmatpush1.xpose.msra.mxu0 0.0
    %1042 = vmatprep.subr.mxu0 0.0
    %1043 = vmatpush1.xpose.msra.mxu0 0.0
    %1044 = vmatprep.subr.mxu0 0.0
    %1045 = vmatpush1.xpose.msra.mxu0 0.0
    %1046 = vmatprep.subr.mxu0 0.0
    %1047 = vmatpush1.xpose.msra.mxu0 0.0
    %1048 = vmatprep.subr.mxu0 0.0
    %1049 = vmatpush1.xpose.msra.mxu0 0.0
    %1050 = vmatprep.subr.mxu0 0.0
    %1051 = vmatpush1.xpose.msra.mxu0 0.0
    %1052 = vmatprep.subr.mxu0 0.0
    %1053 = vmatpush1.xpose.msra.mxu0 0.0
    %1054 = vmatprep.subr.mxu0 0.0
    %1055 = vmatpush1.xpose.msra.mxu0 0.0
    %1056 = vmatprep.subr.mxu0 0.0
    %1057 = vmatpush1.xpose.msra.mxu0 0.0
    %1058 = vmatprep.subr.mxu0 0.0
    %1059 = vmatpush1.xpose.msra.mxu0 0.0
    %1060 = vmatprep.subr.mxu0 0.0
    %1061 = vmatpush1.xpose.msra.mxu0 0.0
    %1062 = vmatprep.subr.mxu0 0.0
    %1063 = vmatpush1.xpose.msra.mxu0 0.0
    %1064 = vmatprep.subr.mxu0 0.0
    %1065 = vmatpush1.xpose.msra.mxu0 0.0
    %1066 = vmatprep.subr.mxu0 0.0
    %1067 = vmatpush1.xpose.msra.mxu0 0.0
    %1068 = vmatprep.subr.mxu0 0.0
    %1069 = vmatpush1.xpose.msra.mxu0 0.0
    %1070 = vmatprep.subr.mxu0 0.0
    %1071 = vmatpush1.xpose.msra.mxu0 0.0
    %1072 = vmatprep.mubr.f32.mxu0 0.0
    %1073 = vmatmul.mubr.f32.gmra.mrb[0].mxu0 %v958
    %v1074 = vpop.f32.mrb[0].mxu0
    %v1075 = vadd.f32 0.0, %v1074
    %v1076 = vpop.f32.mrb[0].mxu0
    %1077 = vdwg.mxu0
    %v1078 = vrot.slane %v1075, 4
    %v1079 = vadd.f32 %v1075, %v1078
    %v1080 = vrot.slane %v1079, 2
    %v1081 = vadd.f32 %v1079, %v1080
    %v1082 = vrot.slane %v1081, 1
    %v1083 = vadd.f32 %v1081, %v1082
    %s1084 = sld [smem:[#allocation2]]
    %v1085 = vstv %s1084
    %v1086 = vadd.f32 %v1083, %v1085
    %v1087 = vxor.u32 %v1086, 2147483648
    %v1088 = vmul.f32 %v1087, 1.442695
    %v1089 = vpow.pop %v1088
    %v1090 = vadd.f32 %v1089, 1.0
    %v1091 = vrcp.pop %v1090
    %v1092 = vmul.f32 1.0, %v1091
    %v1093 = vsub.f32 0.0, %v1092
    %1094 = vst [vmem:[#allocation3] sm:$0x1] %v1093
    // Predicated region
    $region46: #{tpu_custom_call.1} parent=1 // pred_check
      _
    $region47: #{tpu_custom_call.1} parent=1 // pred_check_branch
      %1096 = sbr.rel (0) target = $region49
    $region48: #{tpu_custom_call.1} parent=1 // pred_region
      %s1098 = ssub.s32 16, 16
      %1099 = vsyncadd [#allocation4], %s1098
      %s1101 = sshll.u32 [#allocation3], 4
      %s1102 = int_to_ptr.vmem [resolvable:$true] %s1101
      %1104 = dma.vmem_to_hbm [thread:$0]  %s1102, 16, %s11, [#allocation4]
    $region49: #{tpu_custom_call.1} parent=1 // pred_fallthru
      _
    // Predicated region
    $region50: #{tpu_custom_call.1} parent=1 // pred_check
      _
    $region51: #{tpu_custom_call.1} parent=1 // pred_check_branch
      %1106 = sbr.rel (0) target = $region53
    $region52: #{tpu_custom_call.1} parent=1 // pred_region
      %1107 = dma.done [#allocation4], 16
    $region53: #{tpu_custom_call.1} parent=1 // pred_fallthru
      _
    %1108 = vsyncpa [#allocation4], 1

</llo_original>
